<compile_context>
chip_gen: v7x
topology: tpu7x:2x2x1
jax: 0.10.0
libtpu: 0.0.40
codegen_flags: <defaults>
</compile_context>

<pallas_src>
import jax
import jax.numpy as jnp
import numpy as np
from jax.experimental import pallas as pl
from jax.experimental.pallas import tpu as pltpu


def _round_up(x, m):
    return (x + m - 1) // m * m


# ----------------------------------------------------------------------------
# fused kernel: sigmoid(cls), candidate mask (int8), per-tile candidate count,
#               scores = sigmoid(cls) * sigmoid(centerness)   (bf16 out),
#               FCOS decode: x1 = lx - l, y1 = ly - t, x2 = lx + r, y2 = ly + b
# ----------------------------------------------------------------------------
def _make_fcos_kernel(pre_nms_thresh, hw_valid, tile):
    pre_nms_thresh = float(pre_nms_thresh)
    hw_valid = int(hw_valid)
    tile = int(tile)
    needs_tail_mask = (hw_valid % tile) != 0

    def kernel(cls_ref, ctr_ref, reg_ref, loc_ref,
               scores_ref, mask_ref, boxes_ref, cnt_ref):
        j = pl.program_id(1)

        cls = jax.nn.sigmoid(cls_ref[0].astype(jnp.float32))     # (C, TILE)
        ctr = jax.nn.sigmoid(ctr_ref[0].astype(jnp.float32))     # (1, TILE)

        cand = cls > pre_nms_thresh                              # candidate_inds
        if needs_tail_mask:
            # Last tile of a non-divisible grid reads unspecified lanes past HW;
            # keep them out of the candidate count (output lanes past HW are
            # never written back, so scores/boxes need no masking).
            lane = jax.lax.broadcasted_iota(jnp.int32, (1, tile), 1)
            valid = (j * tile + lane) < hw_valid
            cand = jnp.logical_and(cand, valid)

        scores_ref[0] = (cls * ctr).astype(scores_ref.dtype)     # box_cls * centerness
        mask_ref[0] = cand.astype(jnp.int8)                      # int8: 4x less writeback

        reg = reg_ref[0].astype(jnp.float32)                     # (4, TILE): l, t, r, b
        loc = loc_ref[...].astype(jnp.float32)                   # (2, TILE): x, y
        boxes_ref[0, 0:2, :] = loc - reg[0:2, :]                 # x1, y1
        boxes_ref[0, 2:4, :] = loc + reg[2:4, :]                 # x2, y2

        # Per-(image, tile) partial candidate count; summed + clamped outside.
        tile_count = jnp.sum(cand.astype(jnp.int32), axis=(0, 1), keepdims=True)
        cnt_ref[0, 0] = jnp.broadcast_to(tile_count, (8, 128))

    return kernel


def fcos_single_level_dense(locations, box_cls, box_regression, centerness,
                            pre_nms_thresh, pre_nms_top_n,
                            max_tile=16384, vmem_limit_bytes=48 * 1024 * 1024):
    """Dense hot path of FCOSPostProcessor.forward_for_single_feature_map.

    Inputs (PyTorch conv layout, any float dtype — bf16 recommended):
      locations:      (HW, 2)      per-location (x, y)
      box_cls:        (N, C, H, W)
      box_regression: (N, 4, H, W)
      centerness:     (N, 1, H, W)
    Returns (channel-major, lane-dense, exactly HW locations — no padding):
      scores (N, C, HW) bf16  = sigmoid(cls) * sigmoid(centerness)
      cand   (N, C, HW) int8  = sigmoid(cls) > pre_nms_thresh   (consume as int8)
      top_n  (N,)       int32 = clamp(sum(cand), max=pre_nms_top_n)
      boxes  (N, 4, HW) f32   rows [x1, y1, x2, y2]
    """
    N, C, H, W = box_cls.shape
    HW = H * W

    # Pure reshapes — NCHW with the location axis last is already lane-dense.
    cls = box_cls.reshape(N, C, HW)
    reg = box_regression.reshape(N, 4, HW)
    ctr = centerness.reshape(N, 1, HW)
    loc = jnp.transpose(locations, (1, 0))          # (2, HW), tiny

    # Tile HW so VMEM use is bounded; the grid tolerates a ragged last tile.
    num_tiles = -(-HW // int(max_tile))
    tile = _round_up(-(-HW // num_tiles), 128)

    kernel = _make_fcos_kernel(pre_nms_thresh, HW, tile)
    scores, mask, boxes, cnt = pl.pallas_call(
        kernel,
        out_shape=(
            jax.ShapeDtypeStruct((N, C, HW), jnp.bfloat16),          # scores
            jax.ShapeDtypeStruct((N, C, HW), jnp.int8),              # candidate mask
            jax.ShapeDtypeStruct((N, 4, HW), jnp.float32),           # decoded boxes
            jax.ShapeDtypeStruct((N, num_tiles, 8, 128), jnp.int32), # per-tile counts
        ),
        grid_spec=pltpu.PrefetchScalarGridSpec(
            num_scalar_prefetch=0,
            grid=(N, num_tiles),
            in_specs=[
                pl.BlockSpec((1, C, tile), lambda n, j: (n, 0, j)),
                pl.BlockSpec((1, 1, tile), lambda n, j: (n, 0, j)),
                pl.BlockSpec((1, 4, tile), lambda n, j: (n, 0, j)),
                pl.BlockSpec((2, tile), lambda n, j: (0, j)),
            ],
            out_specs=(
                pl.BlockSpec((1, C, tile), lambda n, j: (n, 0, j)),
                pl.BlockSpec((1, C, tile), lambda n, j: (n, 0, j)),
                pl.BlockSpec((1, 4, tile), lambda n, j: (n, 0, j)),
                pl.BlockSpec((1, 1, 8, 128), lambda n, j: (n, j, 0, 0)),
            ),
        ),
        compiler_params=pltpu.CompilerParams(
            dimension_semantics=("parallel", "parallel"),
            vmem_limit_bytes=int(vmem_limit_bytes),
        ),
    )(cls, ctr, reg, loc)

    # Tiny (N, num_tiles) reduce + clamp(max=pre_nms_top_n) outside the kernel.
    top_n = jnp.minimum(cnt[:, :, 0, 0].sum(axis=1), pre_nms_top_n).astype(jnp.int32)
    return scores, mask, top_n, boxes


# ----------------------------------------------------------------------------
# module wrapper (dense part of FCOSPostProcessor)
# ----------------------------------------------------------------------------
class FCOSPostProcessorPallas:
    def __init__(self, pre_nms_thresh, pre_nms_top_n, nms_thresh, fpn_post_nms_top_n,
                 min_size, num_classes, bbox_aug_enabled=False, max_tile=16384):
        self.pre_nms_thresh = pre_nms_thresh
        self.pre_nms_top_n = pre_nms_top_n
        self.nms_thresh = nms_thresh
        self.fpn_post_nms_top_n = fpn_post_nms_top_n
        self.min_size = min_size
        self.num_classes = num_classes
        self.bbox_aug_enabled = bbox_aug_enabled
        self.max_tile = max_tile

    def forward_for_single_feature_map(self, locations, box_cls, box_regression,
                                       centerness, image_sizes=None):
        scores, cand, top_n, boxes = fcos_single_level_dense(
            locations, box_cls, box_regression, centerness,
            self.pre_nms_thresh, self.pre_nms_top_n, max_tile=self.max_tile)
        # TODO(synk): per-image nonzero gather / topk / sqrt(scores) / clip_to_image /
        # remove_small_boxes / BoxList construction are dynamic-shape; kept outside.
        return scores, cand, top_n, boxes

    def forward(self, locations, box_cls, box_regression, centerness, image_sizes=None):
        per_level = [
            self.forward_for_single_feature_map(l, o, b, c, image_sizes)
            for l, o, b, c in zip(locations, box_cls, box_regression, centerness)
        ]
        # TODO(synk): cat_boxlist + boxlist_ml_nms + kthvalue selection are dynamic-shape.
        return per_level


# ----------------------------------------------------------------------------
# pure-JAX reference (mirrors the PyTorch layout/semantics) for correctness check
# ----------------------------------------------------------------------------
def _reference(locations, box_cls, box_regression, centerness,
               pre_nms_thresh, pre_nms_top_n):
    N, C, H, W = box_cls.shape
    HW = H * W
    cls = jax.nn.sigmoid(
        box_cls.astype(jnp.float32).reshape(N, C, HW).transpose(0, 2, 1))     # (N, HW, C)
    reg = box_regression.astype(jnp.float32).reshape(N, 4, HW).transpose(0, 2, 1)
    ctr = jax.nn.sigmoid(centerness.astype(jnp.float32).reshape(N, HW))       # (N, HW)
    cand = cls > pre_nms_thresh
    top_n = jnp.minimum(cand.reshape(N, -1).sum(1), pre_nms_top_n)
    scores = cls * ctr[:, :, None]
    loc = locations.astype(jnp.float32)
    boxes = jnp.stack([
        loc[None, :, 0] - reg[..., 0],
        loc[None, :, 1] - reg[..., 1],
        loc[None, :, 0] + reg[..., 2],
        loc[None, :, 1] + reg[..., 3]], axis=-1)                              # (N, HW, 4)
    return scores, cand, top_n, boxes


if __name__ == "__main__":
    key = jax.random.PRNGKey(0)
    # H*W = 224 is deliberately NOT a multiple of the 128-lane tile, so the ragged
    # last-tile path (boundary DMA + in-kernel count masking) is exercised.
    N, C, H, W = 2, 4, 16, 14
    HW = H * W

    k1, k2, k3 = jax.random.split(key, 3)
    # Feed the kernel the model's native bf16 (the kernel upcasts per tile).
    box_cls = jax.random.normal(k1, (N, C, H, W), jnp.float32).astype(jnp.bfloat16)
    box_regression = jax.random.uniform(
        k2, (N, 4, H, W), jnp.float32, 0.0, 20.0).astype(jnp.bfloat16)
    centerness = jax.random.normal(k3, (N, 1, H, W), jnp.float32).astype(jnp.bfloat16)

    # FCOS-style locations: grid centers with stride 8 (deterministic).
    stride = 8.0
    xs = (jnp.arange(W, dtype=jnp.float32) + 0.5) * stride
    ys = (jnp.arange(H, dtype=jnp.float32) + 0.5) * stride
    yy, xx = jnp.meshgrid(ys, xs, indexing="ij")
    locations = jnp.stack([xx.reshape(-1), yy.reshape(-1)], axis=-1)          # (HW, 2)

    pre_nms_thresh, pre_nms_top_n = 0.55, 100
    post = FCOSPostProcessorPallas(
        pre_nms_thresh=pre_nms_thresh, pre_nms_top_n=pre_nms_top_n,
        nms_thresh=0.6, fpn_post_nms_top_n=100, min_size=0, num_classes=C + 1,
        max_tile=128)  # small tile in the test -> multi-tile grid + ragged last tile

    scores, cand, top_n, boxes = post.forward_for_single_feature_map(
        locations, box_cls, box_regression, centerness)
    jax.block_until_ready((scores, cand, top_n, boxes))

    r_scores, r_cand, r_topn, r_boxes = _reference(
        locations, box_cls, box_regression, centerness, pre_nms_thresh, pre_nms_top_n)

    # kernel outputs are channel-major (N, C|4, HW); transpose for comparison.
    assert np.allclose(np.asarray(scores, dtype=np.float32).transpose(0, 2, 1),
                       np.asarray(r_scores), atol=1e-2)          # bf16 scores output
    assert np.array_equal(np.asarray(cand).astype(bool).transpose(0, 2, 1),
                          np.asarray(r_cand))
    assert np.array_equal(np.asarray(top_n), np.asarray(r_topn))
    assert np.allclose(np.asarray(boxes).transpose(0, 2, 1), np.asarray(r_boxes),
                       atol=1e-4, rtol=1e-5)

    print("KERNEL_OK")
</pallas_src>

<mosaic_0001>
module attributes {stable_mosaic.version = 11 : i64} {
  func.func @kernel(%arg0: i32, %arg1: i32, %arg2: memref<1x4x128xbf16, #tpu.memory_space<vmem>>, %arg3: memref<1x1x128xbf16, #tpu.memory_space<vmem>>, %arg4: memref<1x4x128xbf16, #tpu.memory_space<vmem>>, %arg5: memref<2x128xf32, #tpu.memory_space<vmem>>, %arg6: memref<1x4x128xbf16, #tpu.memory_space<vmem>>, %arg7: memref<1x4x128xi8, #tpu.memory_space<vmem>>, %arg8: memref<1x4x128xf32, #tpu.memory_space<vmem>>, %arg9: memref<1x1x8x128xi32, #tpu.memory_space<vmem>>) attributes {dimension_semantics = [#tpu.dimension_semantics<parallel>, #tpu.dimension_semantics<parallel>], iteration_bounds = array<i64: 2, 2>, scalar_prefetch = 0 : i64, scratch_operands = 0 : i64, tpu.core_type = #tpu.core_type<tc>, window_params = [{transform_indices = @transform_0, window_bounds = array<i64: 1, 4, 128>}, {transform_indices = @transform_1, window_bounds = array<i64: 1, 1, 128>}, {transform_indices = @transform_2, window_bounds = array<i64: 1, 4, 128>}, {transform_indices = @transform_3, window_bounds = array<i64: 2, 128>}, {transform_indices = @transform_4, window_bounds = array<i64: 1, 4, 128>}, {transform_indices = @transform_5, window_bounds = array<i64: 1, 4, 128>}, {transform_indices = @transform_6, window_bounds = array<i64: 1, 4, 128>}, {transform_indices = @transform_7, window_bounds = array<i64: 1, 1, 8, 128>}]} {
    %c0 = arith.constant 0 : index
    %c0_0 = arith.constant 0 : index
    %c0_1 = arith.constant 0 : index
    %0 = vector.load %arg2[%c0, %c0_0, %c0_1] : memref<1x4x128xbf16, #tpu.memory_space<vmem>>, vector<1x4x128xbf16>
    %1 = vector.shape_cast %0 : vector<1x4x128xbf16> to vector<4x128xbf16>
    %2 = arith.extf %1 : vector<4x128xbf16> to vector<4x128xf32>
    %3 = arith.negf %2 : vector<4x128xf32>
    %4 = math.exp %3 : vector<4x128xf32>
    %cst = arith.constant 1.000000e+00 : f32
    %5 = vector.broadcast %cst : f32 to vector<4x128xf32>
    %6 = arith.addf %5, %4 : vector<4x128xf32>
    %7 = arith.divf %5, %6 : vector<4x128xf32>
    %c0_2 = arith.constant 0 : index
    %c0_3 = arith.constant 0 : index
    %c0_4 = arith.constant 0 : index
    %8 = vector.load %arg3[%c0_2, %c0_3, %c0_4] : memref<1x1x128xbf16, #tpu.memory_space<vmem>>, vector<1x1x128xbf16>
    %9 = vector.shape_cast %8 : vector<1x1x128xbf16> to vector<1x128xbf16>
    %10 = arith.extf %9 : vector<1x128xbf16> to vector<1x128xf32>
    %11 = arith.negf %10 : vector<1x128xf32>
    %12 = math.exp %11 : vector<1x128xf32>
    %cst_5 = arith.constant 1.000000e+00 : f32
    %13 = vector.broadcast %cst_5 : f32 to vector<1x128xf32>
    %14 = arith.addf %13, %12 : vector<1x128xf32>
    %15 = arith.divf %13, %14 : vector<1x128xf32>
    %cst_6 = arith.constant 5.500000e-01 : f32
    %16 = vector.broadcast %cst_6 : f32 to vector<4x128xf32>
    %17 = arith.cmpf ogt, %7, %16 : vector<4x128xf32>
    %18 = tpu.iota {dimensions = array<i32: 1>} : vector<1x128xi32>
    %c128_i32 = arith.constant 128 : i32
    %19 = arith.muli %arg1, %c128_i32 : i32
    %20 = vector.broadcast %19 : i32 to vector<1x128xi32>
    %21 = arith.addi %20, %18 : vector<1x128xi32>
    %c224_i32 = arith.constant 224 : i32
    %22 = vector.broadcast %c224_i32 : i32 to vector<1x128xi32>
    %23 = arith.cmpi slt, %21, %22 : vector<1x128xi32>
    %24 = vector.broadcast %23 : vector<1x128xi1> to vector<4x128xi1>
    %25 = arith.andi %17, %24 : vector<4x128xi1>
    %26 = vector.broadcast %15 : vector<1x128xf32> to vector<4x128xf32>
    %27 = arith.mulf %7, %26 : vector<4x128xf32>
    %28 = arith.truncf %27 : vector<4x128xf32> to vector<4x128xbf16>
    %c0_7 = arith.constant 0 : index
    %c0_8 = arith.constant 0 : index
    %c0_9 = arith.constant 0 : index
    %29 = vector.load %arg6[%c0_7, %c0_8, %c0_9] : memref<1x4x128xbf16, #tpu.memory_space<vmem>>, vector<1x4x128xbf16>
    %30 = vector.shape_cast %29 : vector<1x4x128xbf16> to vector<4x128xbf16>
    %31 = vector.shape_cast %28 : vector<4x128xbf16> to vector<1x4x128xbf16>
    tpu.vector_store %arg6[%c0_7, %c0_8, %c0_9], %31 {strides = array<i32>} : memref<1x4x128xbf16, #tpu.memory_space<vmem>>, vector<1x4x128xbf16>,
    %32 = arith.extui %25 : vector<4x128xi1> to vector<4x128xi8>
    %c0_10 = arith.constant 0 : index
    %c0_11 = arith.constant 0 : index
    %c0_12 = arith.constant 0 : index
    %33 = vector.load %arg7[%c0_10, %c0_11, %c0_12] : memref<1x4x128xi8, #tpu.memory_space<vmem>>, vector<1x4x128xi8>
    %34 = vector.shape_cast %33 : vector<1x4x128xi8> to vector<4x128xi8>
    %35 = vector.shape_cast %32 : vector<4x128xi8> to vector<1x4x128xi8>
    tpu.vector_store %arg7[%c0_10, %c0_11, %c0_12], %35 {strides = array<i32>} : memref<1x4x128xi8, #tpu.memory_space<vmem>>, vector<1x4x128xi8>,
    %c0_13 = arith.constant 0 : index
    %c0_14 = arith.constant 0 : index
    %c0_15 = arith.constant 0 : index
    %36 = vector.load %arg4[%c0_13, %c0_14, %c0_15] : memref<1x4x128xbf16, #tpu.memory_space<vmem>>, vector<1x4x128xbf16>
    %37 = vector.shape_cast %36 : vector<1x4x128xbf16> to vector<4x128xbf16>
    %38 = arith.extf %37 : vector<4x128xbf16> to vector<4x128xf32>
    %c0_16 = arith.constant 0 : index
    %c0_17 = arith.constant 0 : index
    %39 = vector.load %arg5[%c0_16, %c0_17] : memref<2x128xf32, #tpu.memory_space<vmem>>, vector<2x128xf32>
    %40 = vector.extract_strided_slice %38 {offsets = [0, 0], sizes = [2, 128], strides = [1, 1]} : vector<4x128xf32> to vector<2x128xf32>
    %41 = arith.subf %39, %40 : vector<2x128xf32>
    %c0_18 = arith.constant 0 : index
    %c0_19 = arith.constant 0 : index
    %c0_20 = arith.constant 0 : index
    %42 = vector.load %arg8[%c0_18, %c0_19, %c0_20] : memref<1x4x128xf32, #tpu.memory_space<vmem>>, vector<1x2x128xf32>
    %43 = vector.shape_cast %42 : vector<1x2x128xf32> to vector<2x128xf32>
    %44 = vector.shape_cast %41 : vector<2x128xf32> to vector<1x2x128xf32>
    tpu.vector_store %arg8[%c0_18, %c0_19, %c0_20], %44 {strides = array<i32>} : memref<1x4x128xf32, #tpu.memory_space<vmem>>, vector<1x2x128xf32>,
    %45 = vector.extract_strided_slice %38 {offsets = [2, 0], sizes = [2, 128], strides = [1, 1]} : vector<4x128xf32> to vector<2x128xf32>
    %46 = arith.addf %39, %45 : vector<2x128xf32>
    %c0_21 = arith.constant 0 : index
    %c2 = arith.constant 2 : index
    %c0_22 = arith.constant 0 : index
    %47 = vector.load %arg8[%c0_21, %c2, %c0_22] : memref<1x4x128xf32, #tpu.memory_space<vmem>>, vector<1x2x128xf32>
    %48 = vector.shape_cast %47 : vector<1x2x128xf32> to vector<2x128xf32>
    %49 = vector.shape_cast %46 : vector<2x128xf32> to vector<1x2x128xf32>
    tpu.vector_store %arg8[%c0_21, %c2, %c0_22], %49 {strides = array<i32>} : memref<1x4x128xf32, #tpu.memory_space<vmem>>, vector<1x2x128xf32>,
    %50 = arith.extui %25 : vector<4x128xi1> to vector<4x128xi32>
    %51 = vector.shape_cast %50 : vector<4x128xi32> to vector<1x4x128xi32>
    %cst_23 = arith.constant dense<0> : vector<1xi32>
    %52 = vector.multi_reduction <add>, %51, %cst_23 [1, 2] : vector<1x4x128xi32> to vector<1xi32>
    %53 = vector.shape_cast %52 : vector<1xi32> to vector<1x1x1xi32>
    %54 = vector.extract %53[0, 0, 0] : i32 from vector<1x1x1xi32>
    %55 = vector.broadcast %54 : i32 to vector<1x1xi32>
    %56 = vector.shape_cast %55 : vector<1x1xi32> to vector<1x1xi32>
    %57 = vector.broadcast %56 : vector<1x1xi32> to vector<8x128xi32>
    %c0_24 = arith.constant 0 : index
    %c0_25 = arith.constant 0 : index
    %c0_26 = arith.constant 0 : index
    %c0_27 = arith.constant 0 : index
    %58 = vector.load %arg9[%c0_24, %c0_25, %c0_26, %c0_27] : memref<1x1x8x128xi32, #tpu.memory_space<vmem>>, vector<1x1x8x128xi32>
    %59 = vector.shape_cast %58 : vector<1x1x8x128xi32> to vector<8x128xi32>
    %60 = vector.shape_cast %57 : vector<8x128xi32> to vector<1x1x8x128xi32>
    tpu.vector_store %arg9[%c0_24, %c0_25, %c0_26, %c0_27], %60 {strides = array<i32>} : memref<1x1x8x128xi32, #tpu.memory_space<vmem>>, vector<1x1x8x128xi32>,
    return
  }
  func.func @transform_0(%arg0: i32, %arg1: i32) -> (i32, i32, i32) {
    %c0_i32 = arith.constant 0 : i32
    %c0_i32_0 = arith.constant 0 : i32
    return %arg0, %c0_i32, %arg1 : i32, i32, i32
  }
  func.func @transform_1(%arg0: i32, %arg1: i32) -> (i32, i32, i32) {
    %c0_i32 = arith.constant 0 : i32
    %c0_i32_0 = arith.constant 0 : i32
    return %arg0, %c0_i32, %arg1 : i32, i32, i32
  }
  func.func @transform_2(%arg0: i32, %arg1: i32) -> (i32, i32, i32) {
    %c0_i32 = arith.constant 0 : i32
    %c0_i32_0 = arith.constant 0 : i32
    return %arg0, %c0_i32, %arg1 : i32, i32, i32
  }
  func.func @transform_3(%arg0: i32, %arg1: i32) -> (i32, i32) {
    %c0_i32 = arith.constant 0 : i32
    %c0_i32_0 = arith.constant 0 : i32
    return %c0_i32, %arg1 : i32, i32
  }
  func.func @transform_4(%arg0: i32, %arg1: i32) -> (i32, i32, i32) {
    %c0_i32 = arith.constant 0 : i32
    %c0_i32_0 = arith.constant 0 : i32
    return %arg0, %c0_i32, %arg1 : i32, i32, i32
  }
  func.func @transform_5(%arg0: i32, %arg1: i32) -> (i32, i32, i32) {
    %c0_i32 = arith.constant 0 : i32
    %c0_i32_0 = arith.constant 0 : i32
    return %arg0, %c0_i32, %arg1 : i32, i32, i32
  }
  func.func @transform_6(%arg0: i32, %arg1: i32) -> (i32, i32, i32) {
    %c0_i32 = arith.constant 0 : i32
    %c0_i32_0 = arith.constant 0 : i32
    return %arg0, %c0_i32, %arg1 : i32, i32, i32
  }
  func.func @transform_7(%arg0: i32, %arg1: i32) -> (i32, i32, i32, i32) {
    %c0_i32 = arith.constant 0 : i32
    %c0_i32_0 = arith.constant 0 : i32
    %c0_i32_1 = arith.constant 0 : i32
    return %arg0, %arg1, %c0_i32, %c0_i32_0 : i32, i32, i32, i32
  }
}

</mosaic_0001>

<llo_original>
// kernel: tpu_custom_call.1
$region0: #{tpu_custom_call.1}
  #allocation0 [shape = 'u32[]', space=smem, size = 0x4, offset = 0x4, fixed_abs, tag = 'smem constant byte address 0x4 - core index']
  #allocation1 [shape = 'u32[144,128]{1,0:T(1,128)}', space=vmem, size = 0x12000, scoped, tag = 'internal scratch']
  %s0 = inlined_call_operand.hbm [shape: bf16[2,4,224], index: 0, kind: input, shape index: {}]
  %s1 = inlined_call_operand.vmem [shape: bf16[2,1,224], index: 1, kind: input, shape index: {}]
  %s2 = inlined_call_operand.vmem [shape: bf16[2,4,224], index: 2, kind: input, shape index: {}]
  %s3 = inlined_call_operand.vmem [shape: f32[2,224], index: 3, kind: input, shape index: {}]
  %s4 = inlined_call_operand.hbm [shape: bf16[2,4,224], index: 4, kind: output, shape index: {0}]
  %s5 = inlined_call_operand.hbm [shape: s8[2,4,224], index: 5, kind: output, shape index: {1}]
  %s6 = inlined_call_operand.hbm [shape: f32[2,4,224], index: 6, kind: output, shape index: {2}]
  %s7 = inlined_call_operand.hbm [shape: s32[2,2,8,128], index: 7, kind: output, shape index: {3}]
  %8 = xla_tuple %s4, %s5, %s6, %s7
  %s9 = sld [smem:[#allocation0]]
  $region77: #{tpu_custom_call.1} parent=0
    _
  %s11 = ssub.s32 1, %s9
  %s12 = scalar_select 0, %s11, %s9
  $region1: #{tpu_custom_call.1} parent=0
    #allocation2 [shape = 'u8[2048]{0}', space=vmem, size = 0x800, scoped, tag = 'input window, operand 0']
    #allocation3 [shape = 's32[2]{0}', space=sflag, size = 0x8, scoped, tag = 'scoped memory for tpu_custom_call.1']
    #allocation4 [shape = 's32[2]{0}', space=sflag, size = 0x8, scoped, tag = 'scoped memory for tpu_custom_call.1']
    #allocation5 [shape = 'u8[2048]{0}', space=vmem, size = 0x800, scoped, tag = 'output window, operand 0']
    #allocation6 [shape = 'u8[1024]{0}', space=vmem, size = 0x400, scoped, tag = 'output window, operand 1']
    #allocation7 [shape = 's32[2]{0}', space=sflag, size = 0x8, scoped, tag = 'scoped memory for tpu_custom_call.1']
    #allocation8 [shape = 'u8[4096]{0}', space=vmem, size = 0x1000, scoped, tag = 'output window, operand 2']
    #allocation9 [shape = 'u8[8192]{0}', space=vmem, size = 0x2000, scoped, tag = 'output window, operand 3']
    #allocation10 [shape = 's32[2]{0}', space=sflag, size = 0x8, scoped, tag = 'scoped memory for tpu_custom_call.1']
    %13 = vsyncpa [#allocation3], 0
    %s14 = scalar_lea.sflag [#allocation3], 1
    %15 = vsyncpa %s14, 0
    %16 = vsyncpa [#allocation4], 0
    %s17 = scalar_lea.sflag [#allocation4], 1
    %18 = vsyncpa %s17, 0
    %19 = vsyncpa [#allocation7], 0
    %s20 = scalar_lea.sflag [#allocation7], 1
    %21 = vsyncpa %s20, 0
    %22 = vsyncpa [#allocation10], 0
    %s23 = scalar_lea.sflag [#allocation10], 1
    %24 = vsyncpa %s23, 0
    loop: start=0, step=1, limit=6
    $region2: #{tpu_custom_call.1} parent=1 // loop_pre_header
      _
    $region3: #{tpu_custom_call.1} parent=1 // loop_header
      %s26 = sphi 0, %s30
      %p27 = scmp.ge.s32.totalorder %s26, 6
      %s33 = sphi 0, %s45
      %s34 = sphi 0, %s41
      %s35 = sphi 0, %s33
      %s36 = sphi 0, %s34
      %s37 = sphi 0, %s35
      %s38 = sphi 0, %s36
      %s50 = sphi 0, %s52
      %s53 = sphi 0, %s50
      %s54 = sphi 0, %s53
      %s70 = sphi 0, %s54
      %s78 = sphi 0, %s80
      %s81 = sphi 0, %s78
      %s82 = sphi 0, %s81
      %s98 = sphi 0, %s82
      %s106 = sphi 0, %s108
      %s109 = sphi 0, %s106
      %s110 = sphi 0, %s109
      %s126 = sphi 0, %s110
      %s132 = sphi 0, %s134
      %s135 = sphi 0, %s132
      %s136 = sphi 0, %s135
      %s152 = sphi 0, %s136
      %s160 = sphi 0, %s162
      %s163 = sphi 0, %s160
      %s164 = sphi 0, %s163
      %s180 = sphi 0, %s164
      %s188 = sphi 0, %s190
      %s191 = sphi 0, %s188
      %s192 = sphi 0, %s191
      %s208 = sphi 0, %s192
      %s216 = sphi 0, %s218
      %s219 = sphi 0, %s216
      %s220 = sphi 0, %s219
      %s236 = sphi 0, %s220
      %s244 = sphi 0, %s246
      %s247 = sphi 0, %s244
      %s248 = sphi 0, %s247
      %s264 = sphi 0, %s248
    $region4: #{tpu_custom_call.1} parent=1 // loop_header_branch
      %29 = sbr.rel (%p27) target = $region8
    $region5: #{tpu_custom_call.1} parent=1 // loop_body
      %s31 = ssub.s32 %s26, 1
      %s32 = ssub.s32 %s26, 2
      %s39 = sadd.s32 1, %s34
      %p40 = scmp.ge.s32.totalorder %s39, 2
      %s41 = scalar_select %p40, 0, %s39
      %s42 = sadd.s32 1, %s33
      %s43 = scalar_select %p40, %s42, %s33
      %p44 = scmp.ge.s32.totalorder %s43, 2
      %s45 = scalar_select %p44, 0, %s43
      %s46 = ssub.s32 %s33, %s45
      %s47 = ssub.s32 %s34, %s41
      %s48 = sor.u32 %s46, %s47
      %p49 = scmp.eq.s32.totalorder %s48, 0
      %s51 = sadd.s32 %s50, 1
      %s52 = scalar_select %p49, %s50, %s51
      %p55 = pneg %p49
      %p56 = scmp.eq.s32.totalorder %s26, 3
      %p57 = por %p55, %p56
      %p58 = scmp.ne.s32.totalorder %s50, %s53
      %p59 = scmp.eq.s32.totalorder %s26, 0
      %p60 = por %p58, %p59
      %p61 = scmp.ne.s32.totalorder %s50, %s53
      %p62 = scmp.eq.s32.totalorder %s31, 3
      %p63 = por %p61, %p62
      %p64 = scmp.ne.s32.totalorder %s53, %s54
      %p65 = scmp.eq.s32.totalorder %s31, 0
      %p66 = por %p64, %p65
      %p67 = scmp.ne.s32.totalorder %s53, %s54
      %p68 = scmp.eq.s32.totalorder %s32, 3
      %p69 = por %p67, %p68
      %p71 = scmp.ne.s32.totalorder %s54, %s70
      %p72 = scmp.eq.s32.totalorder %s32, 0
      %p73 = por %p71, %p72
      %s74 = ssub.s32 %s33, %s45
      %s75 = ssub.s32 %s34, %s41
      %s76 = sor.u32 %s74, %s75
      %p77 = scmp.eq.s32.totalorder %s76, 0
      %s79 = sadd.s32 %s78, 1
      %s80 = scalar_select %p77, %s78, %s79
      %p83 = pneg %p77
      %p84 = scmp.eq.s32.totalorder %s26, 3
      %p85 = por %p83, %p84
      %p86 = scmp.ne.s32.totalorder %s78, %s81
      %p87 = scmp.eq.s32.totalorder %s26, 0
      %p88 = por %p86, %p87
      %p89 = scmp.ne.s32.totalorder %s78, %s81
      %p90 = scmp.eq.s32.totalorder %s31, 3
      %p91 = por %p89, %p90
      %p92 = scmp.ne.s32.totalorder %s81, %s82
      %p93 = scmp.eq.s32.totalorder %s31, 0
      %p94 = por %p92, %p93
      %p95 = scmp.ne.s32.totalorder %s81, %s82
      %p96 = scmp.eq.s32.totalorder %s32, 3
      %p97 = por %p95, %p96
      %p99 = scmp.ne.s32.totalorder %s82, %s98
      %p100 = scmp.eq.s32.totalorder %s32, 0
      %p101 = por %p99, %p100
      %s102 = ssub.s32 %s33, %s45
      %s103 = ssub.s32 %s34, %s41
      %s104 = sor.u32 %s102, %s103
      %p105 = scmp.eq.s32.totalorder %s104, 0
      %s107 = sadd.s32 %s106, 1
      %s108 = scalar_select %p105, %s106, %s107
      %p111 = pneg %p105
      %p112 = scmp.eq.s32.totalorder %s26, 3
      %p113 = por %p111, %p112
      %p114 = scmp.ne.s32.totalorder %s106, %s109
      %p115 = scmp.eq.s32.totalorder %s26, 0
      %p116 = por %p114, %p115
      %p117 = scmp.ne.s32.totalorder %s106, %s109
      %p118 = scmp.eq.s32.totalorder %s31, 3
      %p119 = por %p117, %p118
      %p120 = scmp.ne.s32.totalorder %s109, %s110
      %p121 = scmp.eq.s32.totalorder %s31, 0
      %p122 = por %p120, %p121
      %p123 = scmp.ne.s32.totalorder %s109, %s110
      %p124 = scmp.eq.s32.totalorder %s32, 3
      %p125 = por %p123, %p124
      %p127 = scmp.ne.s32.totalorder %s110, %s126
      %p128 = scmp.eq.s32.totalorder %s32, 0
      %p129 = por %p127, %p128
      %s130 = ssub.s32 %s34, %s41
      %p131 = scmp.eq.s32.totalorder %s130, 0
      %s133 = sadd.s32 %s132, 1
      %s134 = scalar_select %p131, %s132, %s133
      %p137 = pneg %p131
      %p138 = scmp.eq.s32.totalorder %s26, 3
      %p139 = por %p137, %p138
      %p140 = scmp.ne.s32.totalorder %s132, %s135
      %p141 = scmp.eq.s32.totalorder %s26, 0
      %p142 = por %p140, %p141
      %p143 = scmp.ne.s32.totalorder %s132, %s135
      %p144 = scmp.eq.s32.totalorder %s31, 3
      %p145 = por %p143, %p144
      %p146 = scmp.ne.s32.totalorder %s135, %s136
      %p147 = scmp.eq.s32.totalorder %s31, 0
      %p148 = por %p146, %p147
      %p149 = scmp.ne.s32.totalorder %s135, %s136
      %p150 = scmp.eq.s32.totalorder %s32, 3
      %p151 = por %p149, %p150
      %p153 = scmp.ne.s32.totalorder %s136, %s152
      %p154 = scmp.eq.s32.totalorder %s32, 0
      %p155 = por %p153, %p154
      %s156 = ssub.s32 %s33, %s45
      %s157 = ssub.s32 %s34, %s41
      %s158 = sor.u32 %s156, %s157
      %p159 = scmp.eq.s32.totalorder %s158, 0
      %s161 = sadd.s32 %s160, 1
      %s162 = scalar_select %p159, %s160, %s161
      %p165 = pneg %p159
      %p166 = scmp.eq.s32.totalorder %s26, 3
      %p167 = por %p165, %p166
      %p168 = scmp.ne.s32.totalorder %s160, %s163
      %p169 = scmp.eq.s32.totalorder %s26, 0
      %p170 = por %p168, %p169
      %p171 = scmp.ne.s32.totalorder %s160, %s163
      %p172 = scmp.eq.s32.totalorder %s31, 3
      %p173 = por %p171, %p172
      %p174 = scmp.ne.s32.totalorder %s163, %s164
      %p175 = scmp.eq.s32.totalorder %s31, 0
      %p176 = por %p174, %p175
      %p177 = scmp.ne.s32.totalorder %s163, %s164
      %p178 = scmp.eq.s32.totalorder %s32, 3
      %p179 = por %p177, %p178
      %p181 = scmp.ne.s32.totalorder %s164, %s180
      %p182 = scmp.eq.s32.totalorder %s32, 0
      %p183 = por %p181, %p182
      %s184 = ssub.s32 %s33, %s45
      %s185 = ssub.s32 %s34, %s41
      %s186 = sor.u32 %s184, %s185
      %p187 = scmp.eq.s32.totalorder %s186, 0
      %s189 = sadd.s32 %s188, 1
      %s190 = scalar_select %p187, %s188, %s189
      %p193 = pneg %p187
      %p194 = scmp.eq.s32.totalorder %s26, 3
      %p195 = por %p193, %p194
      %p196 = scmp.ne.s32.totalorder %s188, %s191
      %p197 = scmp.eq.s32.totalorder %s26, 0
      %p198 = por %p196, %p197
      %p199 = scmp.ne.s32.totalorder %s188, %s191
      %p200 = scmp.eq.s32.totalorder %s31, 3
      %p201 = por %p199, %p200
      %p202 = scmp.ne.s32.totalorder %s191, %s192
      %p203 = scmp.eq.s32.totalorder %s31, 0
      %p204 = por %p202, %p203
      %p205 = scmp.ne.s32.totalorder %s191, %s192
      %p206 = scmp.eq.s32.totalorder %s32, 3
      %p207 = por %p205, %p206
      %p209 = scmp.ne.s32.totalorder %s192, %s208
      %p210 = scmp.eq.s32.totalorder %s32, 0
      %p211 = por %p209, %p210
      %s212 = ssub.s32 %s33, %s45
      %s213 = ssub.s32 %s34, %s41
      %s214 = sor.u32 %s212, %s213
      %p215 = scmp.eq.s32.totalorder %s214, 0
      %s217 = sadd.s32 %s216, 1
      %s218 = scalar_select %p215, %s216, %s217
      %p221 = pneg %p215
      %p222 = scmp.eq.s32.totalorder %s26, 3
      %p223 = por %p221, %p222
      %p224 = scmp.ne.s32.totalorder %s216, %s219
      %p225 = scmp.eq.s32.totalorder %s26, 0
      %p226 = por %p224, %p225
      %p227 = scmp.ne.s32.totalorder %s216, %s219
      %p228 = scmp.eq.s32.totalorder %s31, 3
      %p229 = por %p227, %p228
      %p230 = scmp.ne.s32.totalorder %s219, %s220
      %p231 = scmp.eq.s32.totalorder %s31, 0
      %p232 = por %p230, %p231
      %p233 = scmp.ne.s32.totalorder %s219, %s220
      %p234 = scmp.eq.s32.totalorder %s32, 3
      %p235 = por %p233, %p234
      %p237 = scmp.ne.s32.totalorder %s220, %s236
      %p238 = scmp.eq.s32.totalorder %s32, 0
      %p239 = por %p237, %p238
      %s240 = ssub.s32 %s33, %s45
      %s241 = ssub.s32 %s34, %s41
      %s242 = sor.u32 %s240, %s241
      %p243 = scmp.eq.s32.totalorder %s242, 0
      %s245 = sadd.s32 %s244, 1
      %s246 = scalar_select %p243, %s244, %s245
      %p249 = pneg %p243
      %p250 = scmp.eq.s32.totalorder %s26, 3
      %p251 = por %p249, %p250
      %p252 = scmp.ne.s32.totalorder %s244, %s247
      %p253 = scmp.eq.s32.totalorder %s26, 0
      %p254 = por %p252, %p253
      %p255 = scmp.ne.s32.totalorder %s244, %s247
      %p256 = scmp.eq.s32.totalorder %s31, 3
      %p257 = por %p255, %p256
      %p258 = scmp.ne.s32.totalorder %s247, %s248
      %p259 = scmp.eq.s32.totalorder %s31, 0
      %p260 = por %p258, %p259
      %p261 = scmp.ne.s32.totalorder %s247, %s248
      %p262 = scmp.eq.s32.totalorder %s32, 3
      %p263 = por %p261, %p262
      %p265 = scmp.ne.s32.totalorder %s248, %s264
      %p266 = scmp.eq.s32.totalorder %s32, 0
      %p267 = por %p265, %p266
      %p268 = scmp.le.s32.totalorder 1, %s26
      %p269 = scmp.lt.s32.totalorder %s26, 5
      %p270 = pnand %p268, %p269
      %p271 = pneg %p270
      // Predicated region
      $region9: #{tpu_custom_call.1} parent=5 // pred_check
        _
      $region10: #{tpu_custom_call.1} parent=5 // pred_check_branch
        %273 = sbr.rel (%p270) target = $region12
      $region11: #{tpu_custom_call.1} parent=5 // pred_region
        %s274 = ssub.s32 %s26, 1
      $region12: #{tpu_custom_call.1} parent=5 // pred_fallthru
        _
      %p275 = scmp.lt.s32.totalorder %s26, 4
      // Predicated region
      $region13: #{tpu_custom_call.1} parent=5 // pred_check
        %p276 = pneg %p275
      $region14: #{tpu_custom_call.1} parent=5 // pred_check_branch
        %278 = sbr.rel (%p276) target = $region16
      $region15: #{tpu_custom_call.1} parent=5 // pred_region
        // Predicated region
        $region17: #{tpu_custom_call.1} parent=15 // pred_check
          %p279 = pneg %p60
        $region18: #{tpu_custom_call.1} parent=15 // pred_check_branch
          %281 = sbr.rel (%p279) target = $region20
        $region19: #{tpu_custom_call.1} parent=15 // pred_region
          %s282 = sand.u32 %s50, 1
          %s283 = scalar_lea.sflag [#allocation3], %s282
          %s284 = sand.u32 %s50, 1
          %s285 = smul.addr %s284, 2
          %s286 = scalar_lea.vmem [#allocation2], %s285
          %s288 = ssub.s32 32, 32
          %289 = vsyncadd %s283, %s288
          %s290 = smul.addr %s33, 2
          %s291 = sadd.s32 %s34, %s290
          %s292 = smul.addr %s291, 32
          %s293 = scalar_lea.hbm %s0, %s292
          %s295 = sshll.u32 %s286, 4
          %s296 = int_to_ptr.vmem [resolvable:$true] %s295
          %298 = dma.hbm_to_vmem [thread:$0]  %s293, 32, %s296, %s283
        $region20: #{tpu_custom_call.1} parent=15 // pred_fallthru
          _
        // Predicated region
        $region21: #{tpu_custom_call.1} parent=15 // pred_check
          %p299 = pneg %p88
        $region22: #{tpu_custom_call.1} parent=15 // pred_check_branch
          %301 = sbr.rel (%p299) target = $region24
        $region23: #{tpu_custom_call.1} parent=15 // pred_region
          %p302 = scmp.lt.s32.totalorder %s33, 1
          %s303 = scalar_select %p302, %s33, 1
          %p304 = scmp.lt.s32.totalorder %s34, 1
          %s305 = scalar_select %p304, %s34, 1
          %s306 = smul.addr %s303, 2
          %s307 = sadd.s32 %s305, %s306
          %s308 = scalar_lea.vmem %s1, %s307
        $region24: #{tpu_custom_call.1} parent=15 // pred_fallthru
          _
        // Predicated region
        $region25: #{tpu_custom_call.1} parent=15 // pred_check
          %p309 = pneg %p116
        $region26: #{tpu_custom_call.1} parent=15 // pred_check_branch
          %311 = sbr.rel (%p309) target = $region28
        $region27: #{tpu_custom_call.1} parent=15 // pred_region
          %p312 = scmp.lt.s32.totalorder %s33, 1
          %s313 = scalar_select %p312, %s33, 1
          %p314 = scmp.lt.s32.totalorder %s34, 1
          %s315 = scalar_select %p314, %s34, 1
          %s316 = smul.addr %s313, 2
          %s317 = sadd.s32 %s315, %s316
          %s318 = smul.addr %s317, 2
          %s319 = scalar_lea.vmem %s2, %s318
        $region28: #{tpu_custom_call.1} parent=15 // pred_fallthru
          _
        // Predicated region
        $region29: #{tpu_custom_call.1} parent=15 // pred_check
          %p320 = pneg %p142
        $region30: #{tpu_custom_call.1} parent=15 // pred_check_branch
          %322 = sbr.rel (%p320) target = $region32
        $region31: #{tpu_custom_call.1} parent=15 // pred_region
          %p323 = scmp.lt.s32.totalorder %s34, 1
          %s324 = scalar_select %p323, %s34, 1
          %s325 = smul.addr %s324, 2
          %s326 = scalar_lea.vmem %s3, %s325
        $region32: #{tpu_custom_call.1} parent=15 // pred_fallthru
          _
      $region16: #{tpu_custom_call.1} parent=5 // pred_fallthru
        _
      %p327 = scmp.le.s32.totalorder 1, %s26
      %p328 = scmp.lt.s32.totalorder %s26, 5
      %p329 = pnand %p327, %p328
      %p330 = pneg %p329
      // Predicated region
      $region33: #{tpu_custom_call.1} parent=5 // pred_check
        _
      $region34: #{tpu_custom_call.1} parent=5 // pred_check_branch
        %332 = sbr.rel (%p329) target = $region36
      $region35: #{tpu_custom_call.1} parent=5 // pred_region
        %s333 = ssub.s32 %s26, 1
        %s334 = sand.u32 %s53, 1
        %s335 = scalar_lea.sflag [#allocation3], %s334
        %s336 = sand.u32 %s53, 1
        %s337 = smul.addr %s336, 2
        %s338 = scalar_lea.vmem [#allocation2], %s337
        // Predicated region
        $region37: #{tpu_custom_call.1} parent=35 // pred_check
          %p339 = pneg %p66
        $region38: #{tpu_custom_call.1} parent=35 // pred_check_branch
          %341 = sbr.rel (%p339) target = $region40
        $region39: #{tpu_custom_call.1} parent=35 // pred_region
          %342 = dma.done %s335, 32
        $region40: #{tpu_custom_call.1} parent=35 // pred_fallthru
          _
        %s343 = sand.u32 %s53, 1
        %s344 = scalar_lea.sflag [#allocation3], %s343
        %s345 = sand.u32 %s53, 1
        %s346 = smul.addr %s345, 2
        %s347 = scalar_lea.vmem [#allocation2], %s346
        %p348 = pneg %p66
        %p349 = pneg %p63
        %p350 = scmp.lt.s32.totalorder %s35, 1
        %s351 = scalar_select %p350, %s35, 1
        %p352 = scmp.lt.s32.totalorder %s36, 1
        %s353 = scalar_select %p352, %s36, 1
        %s354 = smul.addr %s351, 2
        %s355 = sadd.s32 %s353, %s354
        %s356 = scalar_lea.vmem %s1, %s355
        %p357 = pneg %p94
        %p358 = pneg %p91
        %p359 = scmp.lt.s32.totalorder %s35, 1
        %s360 = scalar_select %p359, %s35, 1
        %p361 = scmp.lt.s32.totalorder %s36, 1
        %s362 = scalar_select %p361, %s36, 1
        %s363 = smul.addr %s360, 2
        %s364 = sadd.s32 %s362, %s363
        %s365 = smul.addr %s364, 2
        %s366 = scalar_lea.vmem %s2, %s365
        %p367 = pneg %p122
        %p368 = pneg %p119
        %p369 = scmp.lt.s32.totalorder %s36, 1
        %s370 = scalar_select %p369, %s36, 1
        %s371 = smul.addr %s370, 2
        %s372 = scalar_lea.vmem %s3, %s371
        %p373 = pneg %p148
        %p374 = pneg %p145
        %p375 = pneg %p176
        %p376 = pneg %p173
        %s377 = sand.u32 %s163, 1
        %s378 = scalar_lea.sflag [#allocation4], %s377
        %s379 = sand.u32 %s163, 1
        %s380 = smul.addr %s379, 2
        %s381 = scalar_lea.vmem [#allocation5], %s380
        %p382 = pneg %p204
        %p383 = pneg %p201
        %s384 = sand.u32 %s31, 1
        %s385 = scalar_lea.sflag [#allocation7], %s384
        %s386 = sand.u32 %s191, 1
        %s387 = scalar_lea.vmem [#allocation6], %s386
        %p388 = pneg %p232
        %p389 = pneg %p229
        %s390 = sand.u32 %s31, 1
        %s391 = scalar_lea.sflag [#allocation7], %s390
        %s392 = sand.u32 %s219, 1
        %s393 = smul.addr %s392, 4
        %s394 = scalar_lea.vmem [#allocation8], %s393
        %p395 = pneg %p260
        %p396 = pneg %p257
        %s397 = sand.u32 %s247, 1
        %s398 = scalar_lea.sflag [#allocation10], %s397
        %s399 = sand.u32 %s247, 1
        %s400 = smul.addr %s399, 8
        %s401 = scalar_lea.vmem [#allocation9], %s400
        %p402 = scmp.lt.s32.totalorder %s35, 1
        %s403 = scalar_select %p402, %s35, 1
        %p404 = scmp.lt.s32.totalorder %s36, 1
        %s405 = scalar_select %p404, %s36, 1
        %s406 = smul.addr %s403, 2
        %s407 = sadd.s32 %s405, %s406
        %s408 = scalar_lea.vmem %s1, %s407
        %p409 = scmp.lt.s32.totalorder %s35, 1
        %s410 = scalar_select %p409, %s35, 1
        %p411 = scmp.lt.s32.totalorder %s36, 1
        %s412 = scalar_select %p411, %s36, 1
        %s413 = smul.addr %s410, 2
        %s414 = sadd.s32 %s412, %s413
        %s415 = smul.addr %s414, 2
        %s416 = scalar_lea.vmem %s2, %s415
        %p417 = scmp.lt.s32.totalorder %s36, 1
        %s418 = scalar_select %p417, %s36, 1
        %s419 = smul.addr %s418, 2
        %s420 = scalar_lea.vmem %s3, %s419
        %v423 = vld [vmem:[%s338] sm:$0x3]
        %v424 = vunpack.c.l.bf16 %v423
        %v425 = vxor.u32 %v424, 2147483648
        %v426 = vmul.f32 %v425, 1.442695
        %v427 = vpow.pop %v426
        %v428 = vadd.f32 %v427, 1.0
        %v429 = vrcp.pop %v428
        %v430 = vmul.f32 1.0, %v429
        %v431 = vld [vmem:[%s408] sm:$0x1]
        %v432 = vunpack.c.l.bf16 %v431
        %v433 = vxor.u32 %v432, 2147483648
        %v434 = vmul.f32 %v433, 1.442695
        %v435 = vpow.pop %v434
        %v436 = vadd.f32 %v435, 1.0
        %v437 = vrcp.pop %v436
        %v438 = vmul.f32 1.0, %v437
        %vm439 = vcmp.gt.f32.partialorder %v430, 0.55
        %v440 = vlaneseq
        %v441 = vand.u32 %v440, 127
        %s442 = smul.u32 %s36, 128
        %v443 = vstv %s442
        %v444 = vadd.s32 %v443, %v441
        %vm445 = vcmp.lt.s32.totalorder %v444, 224
        %v446 = vsel %vm445, 1, 0
        %vm447 = vcmp.eq.s32.totalorder %v446, 1
        %vm448 = vmand %vm439, %vm447
        %v449 = vlaneseq
        %v450 = vshrl.u32 %v449, 7
        %v451 = vsub.s32 0, %v450
        %v452 = vrot.slane %v438, %v451
        %v453 = vmul.f32 %v430, %v452
        %v454 = vpack.c.bf16 %v453, %v453
        %455 = vst [vmem:[%s381] sm:$0x3] %v454
        %v456 = vsel %vm448, 1, 0
        %v457 = vpack.c.b16 %v456, %v456
        %v458 = vpack.c.b8 %v457, %v457
        %vm459 = vnez %v458
        %v460 = vsel %vm459, 16843009, 0
        %461 = vst [vmem:[%s387] sm:$0x1] %v460
        %v462 = vld [vmem:[%s416] sm:$0x3]
        %v463 = vunpack.c.l.bf16 %v462
        %v464 = vld [vmem:[%s420] sm:$0x3]
        %v465 = vsub.f32 %v464, %v463
        %466 = vst [vmem:[%s394] sm:$0x3] %v465
        %v468 = vrot.slane %v463, 2
        %v470 = vadd.f32 %v464, %v468
        %471 = vst [vmem:[%s394 + $0x2] sm:$0x3] %v470
        %vm472 = vcmask 1043456
        %v473 = vsel %vm472, %v456, 0
        %v474 = vand.u32 %v473, 65535
        %v475 = vshrl.u32 %v473, 16
        %v476 = vcvt.s32.f32 %v474
        %v477 = vcvt.s32.f32 %v475
        %478 = vadd.xlane.f32.xlu0 %v476
        %v479 = vpop.xlane.xlu0 %478
        %480 = vadd.xlane.f32.xlu0 %v477
        %v481 = vpop.xlane.xlu0 %480
        %v482 = vcvt.f32.s32 %v479
        %v483 = vcvt.f32.s32 %v481
        %v484 = vshll.u32 %v483, 16
        %v485 = vadd.s32 %v484, %v482
        %v486 = vrot.slane %v485, 4
        %v487 = vadd.s32 %v485, %v486
        %v488 = vrot.slane %v487, 2
        %v489 = vadd.s32 %v487, %v488
        %v490 = vrot.slane %v489, 1
        %v491 = vadd.s32 %v489, %v490
        %s492 = vtos %v491
        %v493 = vstv %s492
        %494 = vst [vmem:[%s401] sm:$0xff] %v493
        %s495 = sand.u32 %s163, 1
        %s496 = scalar_lea.sflag [#allocation4], %s495
        %s497 = sand.u32 %s163, 1
        %s498 = smul.addr %s497, 2
        %s499 = scalar_lea.vmem [#allocation5], %s498
        %s500 = sand.u32 %s31, 1
        %s501 = scalar_lea.sflag [#allocation7], %s500
        %s502 = sand.u32 %s191, 1
        %s503 = scalar_lea.vmem [#allocation6], %s502
        %s504 = sand.u32 %s31, 1
        %s505 = scalar_lea.sflag [#allocation7], %s504
        %s506 = sand.u32 %s219, 1
        %s507 = smul.addr %s506, 4
        %s508 = scalar_lea.vmem [#allocation8], %s507
        %s509 = sand.u32 %s247, 1
        %s510 = scalar_lea.sflag [#allocation10], %s509
        %s511 = sand.u32 %s247, 1
        %s512 = smul.addr %s511, 8
        %s513 = scalar_lea.vmem [#allocation9], %s512
        // Predicated region
        $region41: #{tpu_custom_call.1} parent=35 // pred_check
          %p514 = pneg %p173
        $region42: #{tpu_custom_call.1} parent=35 // pred_check_branch
          %516 = sbr.rel (%p514) target = $region44
        $region43: #{tpu_custom_call.1} parent=35 // pred_region
          %s518 = ssub.s32 32, 32
          %519 = vsyncadd %s496, %s518
          %s520 = smul.addr %s35, 2
          %s521 = sadd.s32 %s36, %s520
          %s522 = smul.addr %s521, 32
          %s523 = scalar_lea.hbm %s4, %s522
          %s525 = sshll.u32 %s499, 4
          %s526 = int_to_ptr.vmem [resolvable:$true] %s525
          %528 = dma.vmem_to_hbm [thread:$0]  %s526, 32, %s523, %s496
        $region44: #{tpu_custom_call.1} parent=35 // pred_fallthru
          _
        // Predicated region
        $region45: #{tpu_custom_call.1} parent=35 // pred_check
          %p529 = pneg %p201
        $region46: #{tpu_custom_call.1} parent=35 // pred_check_branch
          %531 = sbr.rel (%p529) target = $region48
        $region47: #{tpu_custom_call.1} parent=35 // pred_region
          %s533 = ssub.s32 16, 16
          %534 = vsyncadd %s501, %s533
          %s535 = smul.addr %s35, 2
          %s536 = sadd.s32 %s36, %s535
          %s537 = smul.addr %s536, 16
          %s538 = scalar_lea.hbm %s5, %s537
          %s540 = sshll.u32 %s503, 4
          %s541 = int_to_ptr.vmem [resolvable:$true] %s540
          %543 = dma.vmem_to_hbm [thread:$0]  %s541, 16, %s538, %s501
        $region48: #{tpu_custom_call.1} parent=35 // pred_fallthru
          _
        // Predicated region
        $region49: #{tpu_custom_call.1} parent=35 // pred_check
          %p544 = pneg %p229
        $region50: #{tpu_custom_call.1} parent=35 // pred_check_branch
          %546 = sbr.rel (%p544) target = $region52
        $region51: #{tpu_custom_call.1} parent=35 // pred_region
          %s548 = ssub.s32 64, 64
          %549 = vsyncadd %s505, %s548
          %s550 = smul.addr %s35, 2
          %s551 = sadd.s32 %s36, %s550
          %s552 = smul.addr %s551, 64
          %s553 = scalar_lea.hbm %s6, %s552
          %s555 = sshll.u32 %s508, 4
          %s556 = int_to_ptr.vmem [resolvable:$true] %s555
          %558 = dma.vmem_to_hbm [thread:$0]  %s556, 64, %s553, %s505
        $region52: #{tpu_custom_call.1} parent=35 // pred_fallthru
          _
        // Predicated region
        $region53: #{tpu_custom_call.1} parent=35 // pred_check
          %p559 = pneg %p257
        $region54: #{tpu_custom_call.1} parent=35 // pred_check_branch
          %561 = sbr.rel (%p559) target = $region56
        $region55: #{tpu_custom_call.1} parent=35 // pred_region
          %s563 = ssub.s32 128, 128
          %564 = vsyncadd %s510, %s563
          %s565 = smul.addr %s35, 2
          %s566 = sadd.s32 %s36, %s565
          %s567 = smul.addr %s566, 128
          %s568 = scalar_lea.hbm %s7, %s567
          %s570 = sshll.u32 %s513, 4
          %s571 = int_to_ptr.vmem [resolvable:$true] %s570
          %573 = dma.vmem_to_hbm [thread:$0]  %s571, 128, %s568, %s510
        $region56: #{tpu_custom_call.1} parent=35 // pred_fallthru
          _
      $region36: #{tpu_custom_call.1} parent=5 // pred_fallthru
        _
      %p574 = scmp.le.s32.totalorder 2, %s26
      // Predicated region
      $region57: #{tpu_custom_call.1} parent=5 // pred_check
        %p575 = pneg %p574
      $region58: #{tpu_custom_call.1} parent=5 // pred_check_branch
        %577 = sbr.rel (%p575) target = $region60
      $region59: #{tpu_custom_call.1} parent=5 // pred_region
        %s578 = ssub.s32 %s26, 2
        // Predicated region
        $region61: #{tpu_custom_call.1} parent=59 // pred_check
          %p579 = pneg %p179
        $region62: #{tpu_custom_call.1} parent=59 // pred_check_branch
          %581 = sbr.rel (%p579) target = $region64
        $region63: #{tpu_custom_call.1} parent=59 // pred_region
          %s582 = sand.u32 %s164, 1
          %s583 = scalar_lea.sflag [#allocation4], %s582
          %s584 = sand.u32 %s164, 1
          %s585 = smul.addr %s584, 2
          %s586 = scalar_lea.vmem [#allocation5], %s585
          %587 = dma.done %s583, 32
        $region64: #{tpu_custom_call.1} parent=59 // pred_fallthru
          _
        // Predicated region
        $region65: #{tpu_custom_call.1} parent=59 // pred_check
          %p588 = pneg %p207
        $region66: #{tpu_custom_call.1} parent=59 // pred_check_branch
          %590 = sbr.rel (%p588) target = $region68
        $region67: #{tpu_custom_call.1} parent=59 // pred_region
          %s591 = sand.u32 %s32, 1
          %s592 = scalar_lea.sflag [#allocation7], %s591
          %s593 = sand.u32 %s192, 1
          %s594 = scalar_lea.vmem [#allocation6], %s593
          %595 = dma.done %s592, 16
        $region68: #{tpu_custom_call.1} parent=59 // pred_fallthru
          _
        // Predicated region
        $region69: #{tpu_custom_call.1} parent=59 // pred_check
          %p596 = pneg %p235
        $region70: #{tpu_custom_call.1} parent=59 // pred_check_branch
          %598 = sbr.rel (%p596) target = $region72
        $region71: #{tpu_custom_call.1} parent=59 // pred_region
          %s599 = sand.u32 %s32, 1
          %s600 = scalar_lea.sflag [#allocation7], %s599
          %s601 = sand.u32 %s220, 1
          %s602 = smul.addr %s601, 4
          %s603 = scalar_lea.vmem [#allocation8], %s602
          %604 = dma.done %s600, 64
        $region72: #{tpu_custom_call.1} parent=59 // pred_fallthru
          _
        // Predicated region
        $region73: #{tpu_custom_call.1} parent=59 // pred_check
          %p605 = pneg %p263
        $region74: #{tpu_custom_call.1} parent=59 // pred_check_branch
          %607 = sbr.rel (%p605) target = $region76
        $region75: #{tpu_custom_call.1} parent=59 // pred_region
          %s608 = sand.u32 %s248, 1
          %s609 = scalar_lea.sflag [#allocation10], %s608
          %s610 = sand.u32 %s248, 1
          %s611 = smul.addr %s610, 8
          %s612 = scalar_lea.vmem [#allocation9], %s611
          %613 = dma.done %s609, 128
        $region76: #{tpu_custom_call.1} parent=59 // pred_fallthru
          _
      $region60: #{tpu_custom_call.1} parent=5 // pred_fallthru
        _
    $region6: #{tpu_custom_call.1} parent=1 // loop_footer
      %s30 = sadd.s32 1, %s26
    $region7: #{tpu_custom_call.1} parent=1 // loop_footer_branch
      %25 = sbr.rel target = $region3
    $region8: #{tpu_custom_call.1} parent=1 // loop_exit
      _
    %614 = vsyncpa [#allocation3], 1
    %s615 = scalar_lea.sflag [#allocation3], 1
    %616 = vsyncpa %s615, 1
    %617 = vsyncpa [#allocation4], 1
    %s618 = scalar_lea.sflag [#allocation4], 1
    %619 = vsyncpa %s618, 1
    %620 = vsyncpa [#allocation7], 1
    %s621 = scalar_lea.sflag [#allocation7], 1
    %622 = vsyncpa %s621, 1
    %623 = vsyncpa [#allocation10], 1
    %s624 = scalar_lea.sflag [#allocation10], 1
    %625 = vsyncpa %s624, 1

</llo_original>
